<compile_context>
chip_gen: v6e
topology: v6e:2x2x1
jax: 0.10.0
libtpu: 0.0.40
codegen_flags: <defaults>
</compile_context>

<pallas_src>
import jax
import jax.numpy as jnp
from jax.experimental import pallas as pl
from jax.experimental.pallas import tpu as pltpu


def mlp_kernel(x_ref, w1_ref, b1_ref, w4_ref, b4_ref, w5_ref, b5_ref, o_ref):
    x = x_ref[...]                                                      # (42, Bt)
    # fc1 -> relu   : (32, 42) @ (42, Bt) -> (32, Bt)
    h1 = jnp.dot(w1_ref[...], x, preferred_element_type=jnp.float32) + b1_ref[...]
    h1 = jnp.maximum(h1, 0.0)
    # fc4 -> relu   : (16, 32) @ (32, Bt) -> (16, Bt)
    h2 = jnp.dot(w4_ref[...], h1, preferred_element_type=jnp.float32) + b4_ref[...]
    h2 = jnp.maximum(h2, 0.0)
    # fc5 (16 -> 1) off the MXU: broadcast-multiply + sublane reduce -> (1, Bt)
    z = jnp.sum(h2 * w5_ref[...], axis=0, keepdims=True) + b5_ref[...]
    # sigmoid via EUP exp + EUP approx reciprocal
    o_ref[...] = pl.reciprocal(1.0 + jnp.exp(-z), approx=True).astype(o_ref.dtype)


def net_forward(x, params, *, max_tile=2048):
    """x: [B, 42] (PyTorch row-major input). Returns [B, 1] float32."""
    w1, b1, w4, b4, w5, b5 = params          # PyTorch [out, in] weights, [out] biases
    B = x.shape[0]

    # Lane-aligned batch tile; cap it so double-buffered tiles stay small
    # (well under v5e's 16 MiB scoped VMEM and v7x's 64 MiB physical VMEM).
    b_tile = min(max_tile, pl.cdiv(B, 128) * 128)
    b_pad = pl.cdiv(B, b_tile) * b_tile

    # Transpose so batch is the lane (last) axis; zero-pad the extra columns.
    xt = jnp.zeros((42, b_pad), jnp.float32).at[:, :B].set(x.T.astype(jnp.float32))

    # Biases / final weight as column vectors so they broadcast over lanes.
    b1c = b1.reshape(-1, 1)
    b4c = b4.reshape(-1, 1)
    w5c = w5.reshape(-1, 1)                  # (16, 1)
    b5c = b5.reshape(1, 1)                   # (1, 1)

    grid = (b_pad // b_tile,)
    const = lambda shape: pl.BlockSpec(shape, lambda i: (0, 0))

    out = pl.pallas_call(
        mlp_kernel,
        out_shape=jax.ShapeDtypeStruct((1, b_pad), jnp.float32),
        grid=grid,
        in_specs=[
            pl.BlockSpec((42, b_tile), lambda i: (0, i)),   # x tile (pipelined)
            const((32, 42)), const((32, 1)),                # fc1
            const((16, 32)), const((16, 1)),                # fc4
            const((16, 1)), const((1, 1)),                  # fc5
        ],
        out_specs=pl.BlockSpec((1, b_tile), lambda i: (0, i)),
        compiler_params=pltpu.CompilerParams(
            dimension_semantics=("parallel",),               # shard tiles across TCs on v7x
        ),
    )(xt, w1, b1c, w4, b4c, w5c, b5c)

    return out[:, :B].T                                      # back to [B, 1]


def init_params(key):
    # Deterministic init mimicking PyTorch's default Linear init:
    # uniform(-1/sqrt(fan_in), 1/sqrt(fan_in)), weights stored [out, in], bias [out].
    def linear(key, fan_in, fan_out):
        kw, kb = jax.random.split(key)
        bound = 1.0 / jnp.sqrt(float(fan_in))
        w = jax.random.uniform(kw, (fan_out, fan_in), jnp.float32, -bound, bound)
        b = jax.random.uniform(kb, (fan_out,), jnp.float32, -bound, bound)
        return w, b

    k1, k4, k5 = jax.random.split(key, 3)
    w1, b1 = linear(k1, 42, 32)
    w4, b4 = linear(k4, 32, 16)
    w5, b5 = linear(k5, 16, 1)
    return (w1, b1, w4, b4, w5, b5)


if __name__ == "__main__":
    key = jax.random.PRNGKey(0)
    kx, kp = jax.random.split(key)

    B = 8
    x = jax.random.normal(kx, (B, 42), jnp.float32)
    params = init_params(kp)

    out = net_forward(x, params)
    jax.block_until_ready(out)

    # Reference check in plain JAX (PyTorch-layout math).
    w1, b1, w4, b4, w5, b5 = params
    h = jnp.maximum(x @ w1.T + b1, 0.0)
    h = jnp.maximum(h @ w4.T + b4, 0.0)
    ref = jax.nn.sigmoid(h @ w5.T + b5)

    assert out.shape == (B, 1)
    # approx reciprocal (EUP) in the sigmoid => ~1e-4 absolute error budget.
    assert jnp.allclose(out, ref, atol=1e-3, rtol=1e-3), (
        float(jnp.max(jnp.abs(out - ref))))

    print("KERNEL_OK")
</pallas_src>

<mosaic_0001>
module attributes {stable_mosaic.version = 11 : i64} {
  func.func @mlp_kernel(%arg0: i32, %arg1: memref<42x128xf32, #tpu.memory_space<vmem>>, %arg2: memref<32x42xf32, #tpu.memory_space<vmem>>, %arg3: memref<32x1xf32, #tpu.memory_space<vmem>>, %arg4: memref<16x32xf32, #tpu.memory_space<vmem>>, %arg5: memref<16x1xf32, #tpu.memory_space<vmem>>, %arg6: memref<16x1xf32, #tpu.memory_space<vmem>>, %arg7: memref<1x1xf32, #tpu.memory_space<vmem>>, %arg8: memref<1x128xf32, #tpu.memory_space<vmem>>) attributes {dimension_semantics = [#tpu.dimension_semantics<parallel>], iteration_bounds = array<i64: 1>, scalar_prefetch = 0 : i64, scratch_operands = 0 : i64, tpu.core_type = #tpu.core_type<tc>, window_params = [{transform_indices = @transform_0, window_bounds = array<i64: 42, 128>}, {pipeline_mode = #tpu.pipeline_mode<synchronous>, transform_indices = @transform_1, window_bounds = array<i64: 32, 42>}, {pipeline_mode = #tpu.pipeline_mode<synchronous>, transform_indices = @transform_2, window_bounds = array<i64: 32, 1>}, {pipeline_mode = #tpu.pipeline_mode<synchronous>, transform_indices = @transform_3, window_bounds = array<i64: 16, 32>}, {pipeline_mode = #tpu.pipeline_mode<synchronous>, transform_indices = @transform_4, window_bounds = array<i64: 16, 1>}, {pipeline_mode = #tpu.pipeline_mode<synchronous>, transform_indices = @transform_5, window_bounds = array<i64: 16, 1>}, {pipeline_mode = #tpu.pipeline_mode<synchronous>, transform_indices = @transform_6, window_bounds = array<i64: 1, 1>}, {transform_indices = @transform_7, window_bounds = array<i64: 1, 128>}]} {
    %c0 = arith.constant 0 : index
    %c0_0 = arith.constant 0 : index
    %0 = vector.load %arg1[%c0, %c0_0] : memref<42x128xf32, #tpu.memory_space<vmem>>, vector<42x128xf32>
    %c0_1 = arith.constant 0 : index
    %c0_2 = arith.constant 0 : index
    %1 = vector.load %arg2[%c0_1, %c0_2] : memref<32x42xf32, #tpu.memory_space<vmem>>, vector<32x42xf32>
    %cst = arith.constant dense<0.000000e+00> : vector<32x128xf32>
    %2 = tpu.matmul %1, %0, %cst {dimension_numbers = #tpu.dot_dimension_numbers<[1], [0], [0], [1], [0, 0, 1, 1], [], []>} : vector<32x42xf32>, vector<42x128xf32>, vector<32x128xf32> -> vector<32x128xf32>
    %c0_3 = arith.constant 0 : index
    %c0_4 = arith.constant 0 : index
    %3 = vector.load %arg3[%c0_3, %c0_4] : memref<32x1xf32, #tpu.memory_space<vmem>>, vector<32x1xf32>
    %4 = vector.broadcast %3 : vector<32x1xf32> to vector<32x128xf32>
    %5 = arith.addf %2, %4 : vector<32x128xf32>
    %cst_5 = arith.constant 0.000000e+00 : f32
    %6 = vector.broadcast %cst_5 : f32 to vector<32x128xf32>
    %7 = arith.maximumf %5, %6 : vector<32x128xf32>
    %c0_6 = arith.constant 0 : index
    %c0_7 = arith.constant 0 : index
    %8 = vector.load %arg4[%c0_6, %c0_7] : memref<16x32xf32, #tpu.memory_space<vmem>>, vector<16x32xf32>
    %cst_8 = arith.constant dense<0.000000e+00> : vector<16x128xf32>
    %9 = tpu.matmul %8, %7, %cst_8 {dimension_numbers = #tpu.dot_dimension_numbers<[1], [0], [0], [1], [0, 0, 1, 1], [], []>} : vector<16x32xf32>, vector<32x128xf32>, vector<16x128xf32> -> vector<16x128xf32>
    %c0_9 = arith.constant 0 : index
    %c0_10 = arith.constant 0 : index
    %10 = vector.load %arg5[%c0_9, %c0_10] : memref<16x1xf32, #tpu.memory_space<vmem>>, vector<16x1xf32>
    %11 = vector.broadcast %10 : vector<16x1xf32> to vector<16x128xf32>
    %12 = arith.addf %9, %11 : vector<16x128xf32>
    %cst_11 = arith.constant 0.000000e+00 : f32
    %13 = vector.broadcast %cst_11 : f32 to vector<16x128xf32>
    %14 = arith.maximumf %12, %13 : vector<16x128xf32>
    %c0_12 = arith.constant 0 : index
    %c0_13 = arith.constant 0 : index
    %15 = vector.load %arg6[%c0_12, %c0_13] : memref<16x1xf32, #tpu.memory_space<vmem>>, vector<16x1xf32>
    %16 = vector.broadcast %15 : vector<16x1xf32> to vector<16x128xf32>
    %17 = arith.mulf %14, %16 : vector<16x128xf32>
    %cst_14 = arith.constant dense<0.000000e+00> : vector<128xf32>
    %18 = vector.multi_reduction <add>, %17, %cst_14 [0] : vector<16x128xf32> to vector<128xf32>
    %19 = vector.shape_cast %18 : vector<128xf32> to vector<1x128xf32>
    %c0_15 = arith.constant 0 : index
    %c0_16 = arith.constant 0 : index
    %20 = vector.load %arg7[%c0_15, %c0_16] : memref<1x1xf32, #tpu.memory_space<vmem>>, vector<1x1xf32>
    %21 = vector.broadcast %20 : vector<1x1xf32> to vector<1x128xf32>
    %22 = arith.addf %19, %21 : vector<1x128xf32>
    %cst_17 = arith.constant 0.000000e+00 : f32
    %23 = vector.broadcast %cst_17 : f32 to vector<1x128xf32>
    %24 = arith.subf %23, %22 : vector<1x128xf32>
    %25 = math.exp %24 : vector<1x128xf32>
    %cst_18 = arith.constant 1.000000e+00 : f32
    %26 = vector.broadcast %cst_18 : f32 to vector<1x128xf32>
    %27 = arith.addf %26, %25 : vector<1x128xf32>
    %28 = tpu.reciprocal %27 {approx = true} : vector<1x128xf32> -> vector<1x128xf32>
    %c0_19 = arith.constant 0 : index
    %c0_20 = arith.constant 0 : index
    %29 = vector.load %arg8[%c0_19, %c0_20] : memref<1x128xf32, #tpu.memory_space<vmem>>, vector<1x128xf32>
    tpu.vector_store %arg8[%c0_19, %c0_20], %28 {strides = array<i32>} : memref<1x128xf32, #tpu.memory_space<vmem>>, vector<1x128xf32>,
    return
  }
  func.func @transform_0(%arg0: i32) -> (i32, i32) {
    %c0_i32 = arith.constant 0 : i32
    %c0_i32_0 = arith.constant 0 : i32
    return %c0_i32, %arg0 : i32, i32
  }
  func.func @transform_1(%arg0: i32) -> (i32, i32) {
    %c0_i32 = arith.constant 0 : i32
    %c0_i32_0 = arith.constant 0 : i32
    %c0_i32_1 = arith.constant 0 : i32
    return %c0_i32, %c0_i32_0 : i32, i32
  }
  func.func @transform_2(%arg0: i32) -> (i32, i32) {
    %c0_i32 = arith.constant 0 : i32
    %c0_i32_0 = arith.constant 0 : i32
    %c0_i32_1 = arith.constant 0 : i32
    return %c0_i32, %c0_i32_0 : i32, i32
  }
  func.func @transform_3(%arg0: i32) -> (i32, i32) {
    %c0_i32 = arith.constant 0 : i32
    %c0_i32_0 = arith.constant 0 : i32
    %c0_i32_1 = arith.constant 0 : i32
    return %c0_i32, %c0_i32_0 : i32, i32
  }
  func.func @transform_4(%arg0: i32) -> (i32, i32) {
    %c0_i32 = arith.constant 0 : i32
    %c0_i32_0 = arith.constant 0 : i32
    %c0_i32_1 = arith.constant 0 : i32
    return %c0_i32, %c0_i32_0 : i32, i32
  }
  func.func @transform_5(%arg0: i32) -> (i32, i32) {
    %c0_i32 = arith.constant 0 : i32
    %c0_i32_0 = arith.constant 0 : i32
    %c0_i32_1 = arith.constant 0 : i32
    return %c0_i32, %c0_i32_0 : i32, i32
  }
  func.func @transform_6(%arg0: i32) -> (i32, i32) {
    %c0_i32 = arith.constant 0 : i32
    %c0_i32_0 = arith.constant 0 : i32
    %c0_i32_1 = arith.constant 0 : i32
    return %c0_i32, %c0_i32_0 : i32, i32
  }
  func.func @transform_7(%arg0: i32) -> (i32, i32) {
    %c0_i32 = arith.constant 0 : i32
    %c0_i32_0 = arith.constant 0 : i32
    return %c0_i32, %arg0 : i32, i32
  }
}

</mosaic_0001>

<llo_original>
// kernel: tpu_custom_call.1
$region0: #{tpu_custom_call.1}
  #allocation0 [shape = 'u32[]', space=smem, size = 0x4, offset = 0x4, fixed_abs, tag = 'smem constant byte address 0x4 - core index']
  #allocation1 [shape = 'u32[144,128]{1,0:T(1,128)}', space=vmem, size = 0x12000, scoped, tag = 'internal scratch']
  #allocation2 [shape = 'f32[1,1]{1,0:T(1,128)S(1)}', space=vmem, size = 0x200, scoped, tag = 'scoped memory for tpu_custom_call.1']
  %s0 = inlined_call_operand.vmem [shape: f32[42,128], index: 0, kind: input, shape index: {}]
  %s1 = inlined_call_operand.hbm [shape: f32[32,42], index: 1, kind: input, shape index: {}]
  %s2 = inlined_call_operand.vmem [shape: f32[32,1], index: 2, kind: input, shape index: {}]
  %s3 = inlined_call_operand.vmem [shape: f32[16,32], index: 3, kind: input, shape index: {}]
  %s4 = inlined_call_operand.vmem [shape: f32[16,1], index: 4, kind: input, shape index: {}]
  %s5 = inlined_call_operand.vmem [shape: f32[16,1], index: 5, kind: input, shape index: {}]
  %s6 = inlined_call_operand.<no memory space> [shape: f32[1,1], index: 6, kind: input, shape index: {}]
  %s7 = inlined_call_operand.hbm [shape: f32[1,128], index: 7, kind: output, shape index: {}]
  %s8 = sld [smem:[#allocation0]]
  $region42: #{tpu_custom_call.1} parent=0
    _
  %s10 = ssub.s32 1, %s8
  %s11 = scalar_select 0, %s10, %s8
  %v12 = vstv %s6
  %13 = vst [vmem:[#allocation2] sm:$0x1] %v12
  $region1: #{tpu_custom_call.1} parent=0
    #allocation3 [shape = 'u8[16384]{0}', space=vmem, size = 0x4000, scoped, tag = 'input window, operand 1, single buffered']
    #allocation4 [shape = 's32[1]{0}', space=sflag, size = 0x4, scoped, tag = 'scoped memory for tpu_custom_call.1']
    #allocation5 [shape = 's32[1]{0}', space=sflag, size = 0x4, scoped, tag = 'scoped memory for tpu_custom_call.1']
    #allocation6 [shape = 'u8[512]{0}', space=vmem, size = 0x400, scoped, tag = 'output window, operand 0, single buffered']
    %14 = vsyncpa [#allocation4], 0
    %15 = vsyncpa [#allocation5], 0
    // Predicated region
    $region2: #{tpu_custom_call.1} parent=1 // pred_check
      _
    $region3: #{tpu_custom_call.1} parent=1 // pred_check_branch
      %17 = sbr.rel (0) target = $region5
    $region4: #{tpu_custom_call.1} parent=1 // pred_region
      _
    $region5: #{tpu_custom_call.1} parent=1 // pred_fallthru
      _
    // Predicated region
    $region6: #{tpu_custom_call.1} parent=1 // pred_check
      _
    $region7: #{tpu_custom_call.1} parent=1 // pred_check_branch
      %19 = sbr.rel (0) target = $region9
    $region8: #{tpu_custom_call.1} parent=1 // pred_region
      %s21 = ssub.s32 512, 512
      %22 = vsyncadd [#allocation4], %s21
      %s23 = sshll.u32 [#allocation3], 4
      %s24 = int_to_ptr.vmem [resolvable:$true] %s23
      %29 = dma.hbm_to_vmem [thread:$0]  %s1, 512, %s24, [#allocation4], 128, 128, 8
    $region9: #{tpu_custom_call.1} parent=1 // pred_fallthru
      _
    // Predicated region
    $region10: #{tpu_custom_call.1} parent=1 // pred_check
      _
    $region11: #{tpu_custom_call.1} parent=1 // pred_check_branch
      %31 = sbr.rel (0) target = $region13
    $region12: #{tpu_custom_call.1} parent=1 // pred_region
      _
    $region13: #{tpu_custom_call.1} parent=1 // pred_fallthru
      _
    // Predicated region
    $region14: #{tpu_custom_call.1} parent=1 // pred_check
      _
    $region15: #{tpu_custom_call.1} parent=1 // pred_check_branch
      %33 = sbr.rel (0) target = $region17
    $region16: #{tpu_custom_call.1} parent=1 // pred_region
      _
    $region17: #{tpu_custom_call.1} parent=1 // pred_fallthru
      _
    // Predicated region
    $region18: #{tpu_custom_call.1} parent=1 // pred_check
      _
    $region19: #{tpu_custom_call.1} parent=1 // pred_check_branch
      %35 = sbr.rel (0) target = $region21
    $region20: #{tpu_custom_call.1} parent=1 // pred_region
      _
    $region21: #{tpu_custom_call.1} parent=1 // pred_fallthru
      _
    // Predicated region
    $region22: #{tpu_custom_call.1} parent=1 // pred_check
      _
    $region23: #{tpu_custom_call.1} parent=1 // pred_check_branch
      %37 = sbr.rel (0) target = $region25
    $region24: #{tpu_custom_call.1} parent=1 // pred_region
      _
    $region25: #{tpu_custom_call.1} parent=1 // pred_fallthru
      _
    // Predicated region
    $region26: #{tpu_custom_call.1} parent=1 // pred_check
      _
    $region27: #{tpu_custom_call.1} parent=1 // pred_check_branch
      %39 = sbr.rel (0) target = $region29
    $region28: #{tpu_custom_call.1} parent=1 // pred_region
      _
    $region29: #{tpu_custom_call.1} parent=1 // pred_fallthru
      _
    // Predicated region
    $region30: #{tpu_custom_call.1} parent=1 // pred_check
      _
    $region31: #{tpu_custom_call.1} parent=1 // pred_check_branch
      %41 = sbr.rel (0) target = $region33
    $region32: #{tpu_custom_call.1} parent=1 // pred_region
      %42 = dma.done [#allocation4], 512
    $region33: #{tpu_custom_call.1} parent=1 // pred_fallthru
      _
    %v43 = vld [vmem:[%s0] sm:$0xff]
    %v44 = vld [vmem:[%s0 + $0x8] sm:$0xff]
    %v45 = vld [vmem:[%s0 + $0x10] sm:$0xff]
    %v46 = vld [vmem:[%s0 + $0x18] sm:$0xff]
    %v47 = vld [vmem:[%s0 + $0x20] sm:$0xff]
    %v48 = vld [vmem:[%s0 + $0x28] sm:$0x3]
    %v49 = vld [vmem:[#allocation3] sm:$0xff]
    %v50 = vld [vmem:[#allocation3 + $0x8] sm:$0xff]
    %v51 = vld [vmem:[#allocation3 + $0x10] sm:$0xff]
    %v52 = vld [vmem:[#allocation3 + $0x18] sm:$0xff]
    %v53 = vld [vmem:[%s2] sm:$0xff]
    %v54 = vld [vmem:[%s2 + $0x8] sm:$0xff]
    %v55 = vld [vmem:[%s2 + $0x10] sm:$0xff]
    %v56 = vld [vmem:[%s2 + $0x18] sm:$0xff]
    %58 = vset.pattern.permute.xlu0 0
    %59 = vperm.xlu0 %58, %v53
    %v60 = vpop.permute.xlu0 %59
    %63 = vset.pattern.permute.xlu0 0
    %64 = vperm.xlu0 %63, %v54
    %v65 = vpop.permute.xlu0 %64
    %68 = vset.pattern.permute.xlu0 0
    %69 = vperm.xlu0 %68, %v55
    %v70 = vpop.permute.xlu0 %69
    %73 = vset.pattern.permute.xlu0 0
    %74 = vperm.xlu0 %73, %v56
    %v75 = vpop.permute.xlu0 %74
    %vm77 = vcmask 343040
    %v79 = vsel %vm77, %v49, 0
    %v82 = vsel %vm77, %v50, 0
    %v85 = vsel %vm77, %v51, 0
    %v88 = vsel %vm77, %v52, 0
    %vm90 = vcmask 1041408
    %v92 = vsel %vm90, %v48, 0
    %94 = vmatprep.subr.mxu0 0.0
    %95 = vmatpush1.msra.mxu0 0.0
    %96 = vmatprep.subr.mxu0 0.0
    %97 = vmatpush1.msra.mxu0 0.0
    %98 = vmatprep.subr.mxu0 0.0
    %99 = vmatpush1.msra.mxu0 0.0
    %100 = vmatprep.subr.mxu0 0.0
    %101 = vmatpush1.msra.mxu0 0.0
    %102 = vmatprep.subr.mxu0 0.0
    %103 = vmatpush1.msra.mxu0 0.0
    %104 = vmatprep.subr.mxu0 0.0
    %105 = vmatpush1.msra.mxu0 0.0
    %106 = vmatprep.subr.mxu0 0.0
    %107 = vmatpush1.msra.mxu0 0.0
    %108 = vmatprep.subr.mxu0 0.0
    %109 = vmatpush1.msra.mxu0 0.0
    %110 = vmatprep.subr.mxu0 0.0
    %111 = vmatpush1.msra.mxu0 0.0
    %112 = vmatprep.subr.mxu0 0.0
    %113 = vmatpush1.msra.mxu0 0.0
    %114 = vmatprep.subr.mxu0 0.0
    %115 = vmatpush1.msra.mxu0 %v92
    %116 = vmatprep.subr.mxu0 0.0
    %117 = vmatpush1.msra.mxu0 %v47
    %118 = vmatprep.subr.mxu0 0.0
    %119 = vmatpush1.msra.mxu0 %v46
    %120 = vmatprep.subr.mxu0 0.0
    %121 = vmatpush1.msra.mxu0 %v45
    %122 = vmatprep.subr.mxu0 0.0
    %123 = vmatpush1.msra.mxu0 %v44
    %124 = vmatprep.subr.mxu0 0.0
    %125 = vmatpush1.msra.mxu0 %v43
    %126 = vmatprep.subr.mxu0 0.0
    %127 = vmatpush2.msra.mxu0 0.0
    %128 = vmatprep.subr.mxu0 0.0
    %129 = vmatpush2.msra.mxu0 0.0
    %130 = vmatprep.subr.mxu0 0.0
    %131 = vmatpush2.msra.mxu0 0.0
    %132 = vmatprep.subr.mxu0 0.0
    %133 = vmatpush2.msra.mxu0 0.0
    %134 = vmatprep.subr.mxu0 0.0
    %135 = vmatpush2.msra.mxu0 0.0
    %136 = vmatprep.subr.mxu0 0.0
    %137 = vmatpush2.msra.mxu0 0.0
    %138 = vmatprep.subr.mxu0 0.0
    %139 = vmatpush2.msra.mxu0 0.0
    %140 = vmatprep.subr.mxu0 0.0
    %141 = vmatpush2.msra.mxu0 0.0
    %142 = vmatprep.subr.mxu0 0.0
    %143 = vmatpush2.msra.mxu0 0.0
    %144 = vmatprep.subr.mxu0 0.0
    %145 = vmatpush2.msra.mxu0 0.0
    %146 = vmatprep.subr.mxu0 0.0
    %147 = vmatpush2.msra.mxu0 0.0
    %148 = vmatprep.subr.mxu0 0.0
    %149 = vmatpush2.msra.mxu0 0.0
    %150 = vmatprep.subr.mxu0 0.0
    %151 = vmatpush2.msra.mxu0 0.0
    %152 = vmatprep.subr.mxu0 0.0
    %153 = vmatpush2.msra.mxu0 0.0
    %154 = vmatprep.subr.mxu0 0.0
    %155 = vmatpush2.msra.mxu0 0.0
    %156 = vmatprep.subr.mxu0 0.0
    %157 = vmatpush2.msra.mxu0 0.0
    %158 = vmatprep.mubr.f32.mxu0 0.0
    %159 = vmatmul.mubr.f32.gmra.mxu0 %v79
    %v160 = vpop.f32.mrf.mxu0
    %v161 = vadd.f32 %v60, %v160
    %v162 = vpop.f32.mrf.mxu0
    %163 = vmatprep.mubr.f32.mxu0 0.0
    %164 = vmatmul.mubr.f32.gmra.mxu0 %v82
    %v165 = vpop.f32.mrf.mxu0
    %v166 = vadd.f32 %v65, %v165
    %v167 = vpop.f32.mrf.mxu0
    %168 = vmatprep.mubr.f32.mxu0 0.0
    %169 = vmatmul.mubr.f32.gmra.mxu0 %v85
    %v170 = vpop.f32.mrf.mxu0
    %v171 = vadd.f32 %v70, %v170
    %v172 = vpop.f32.mrf.mxu0
    %173 = vmatprep.mubr.f32.mxu0 0.0
    %174 = vmatmul.mubr.f32.gmra.mxu0 %v88
    %v175 = vpop.f32.mrf.mxu0
    %v176 = vadd.f32 %v75, %v175
    %v177 = vpop.f32.mrf.mxu0
    %178 = vdwg.mxu0
    %v179 = vmax.f32 %v161, 0.0
    %v180 = vmax.f32 %v166, 0.0
    %v181 = vmax.f32 %v171, 0.0
    %v182 = vmax.f32 %v176, 0.0
    %v183 = vld [vmem:[%s3] sm:$0xff]
    %v184 = vld [vmem:[%s3 + $0x8] sm:$0xff]
    %v185 = vld [vmem:[%s4] sm:$0xff]
    %v186 = vld [vmem:[%s4 + $0x8] sm:$0xff]
    %188 = vset.pattern.permute.xlu0 0
    %189 = vperm.xlu0 %188, %v185
    %v190 = vpop.permute.xlu0 %189
    %193 = vset.pattern.permute.xlu0 0
    %194 = vperm.xlu0 %193, %v186
    %v195 = vpop.permute.xlu0 %194
    %vm197 = vcmask 261120
    %v199 = vsel %vm197, %v183, 0
    %v202 = vsel %vm197, %v184, 0
    %204 = vmatprep.subr.mxu0 0.0
    %205 = vmatpush1.msra.mxu0 0.0
    %206 = vmatprep.subr.mxu0 0.0
    %207 = vmatpush1.msra.mxu0 0.0
    %208 = vmatprep.subr.mxu0 0.0
    %209 = vmatpush1.msra.mxu0 0.0
    %210 = vmatprep.subr.mxu0 0.0
    %211 = vmatpush1.msra.mxu0 0.0
    %212 = vmatprep.subr.mxu0 0.0
    %213 = vmatpush1.msra.mxu0 0.0
    %214 = vmatprep.subr.mxu0 0.0
    %215 = vmatpush1.msra.mxu0 0.0
    %216 = vmatprep.subr.mxu0 0.0
    %217 = vmatpush1.msra.mxu0 0.0
    %218 = vmatprep.subr.mxu0 0.0
    %219 = vmatpush1.msra.mxu0 0.0
    %220 = vmatprep.subr.mxu0 0.0
    %221 = vmatpush1.msra.mxu0 0.0
    %222 = vmatprep.subr.mxu0 0.0
    %223 = vmatpush1.msra.mxu0 0.0
    %224 = vmatprep.subr.mxu0 0.0
    %225 = vmatpush1.msra.mxu0 0.0
    %226 = vmatprep.subr.mxu0 0.0
    %227 = vmatpush1.msra.mxu0 0.0
    %228 = vmatprep.subr.mxu0 0.0
    %229 = vmatpush1.msra.mxu0 %v182
    %230 = vmatprep.subr.mxu0 0.0
    %231 = vmatpush1.msra.mxu0 %v181
    %232 = vmatprep.subr.mxu0 0.0
    %233 = vmatpush1.msra.mxu0 %v180
    %234 = vmatprep.subr.mxu0 0.0
    %235 = vmatpush1.msra.mxu0 %v179
    %236 = vmatprep.subr.mxu0 0.0
    %237 = vmatpush2.msra.mxu0 0.0
    %238 = vmatprep.subr.mxu0 0.0
    %239 = vmatpush2.msra.mxu0 0.0
    %240 = vmatprep.subr.mxu0 0.0
    %241 = vmatpush2.msra.mxu0 0.0
    %242 = vmatprep.subr.mxu0 0.0
    %243 = vmatpush2.msra.mxu0 0.0
    %244 = vmatprep.subr.mxu0 0.0
    %245 = vmatpush2.msra.mxu0 0.0
    %246 = vmatprep.subr.mxu0 0.0
    %247 = vmatpush2.msra.mxu0 0.0
    %248 = vmatprep.subr.mxu0 0.0
    %249 = vmatpush2.msra.mxu0 0.0
    %250 = vmatprep.subr.mxu0 0.0
    %251 = vmatpush2.msra.mxu0 0.0
    %252 = vmatprep.subr.mxu0 0.0
    %253 = vmatpush2.msra.mxu0 0.0
    %254 = vmatprep.subr.mxu0 0.0
    %255 = vmatpush2.msra.mxu0 0.0
    %256 = vmatprep.subr.mxu0 0.0
    %257 = vmatpush2.msra.mxu0 0.0
    %258 = vmatprep.subr.mxu0 0.0
    %259 = vmatpush2.msra.mxu0 0.0
    %260 = vmatprep.subr.mxu0 0.0
    %261 = vmatpush2.msra.mxu0 0.0
    %262 = vmatprep.subr.mxu0 0.0
    %263 = vmatpush2.msra.mxu0 0.0
    %264 = vmatprep.subr.mxu0 0.0
    %265 = vmatpush2.msra.mxu0 0.0
    %266 = vmatprep.subr.mxu0 0.0
    %267 = vmatpush2.msra.mxu0 0.0
    %268 = vmatprep.mubr.f32.mxu0 0.0
    %269 = vmatmul.mubr.f32.gmra.mxu0 %v199
    %v270 = vpop.f32.mrf.mxu0
    %v271 = vadd.f32 %v190, %v270
    %v272 = vpop.f32.mrf.mxu0
    %273 = vmatprep.mubr.f32.mxu0 0.0
    %274 = vmatmul.mubr.f32.gmra.mxu0 %v202
    %v275 = vpop.f32.mrf.mxu0
    %v276 = vadd.f32 %v195, %v275
    %v277 = vpop.f32.mrf.mxu0
    %278 = vdwg.mxu0
    %v279 = vmax.f32 %v271, 0.0
    %v280 = vmax.f32 %v276, 0.0
    %v281 = vld [vmem:[%s5] sm:$0xff]
    %v282 = vld [vmem:[%s5 + $0x8] sm:$0xff]
    %284 = vset.pattern.permute.xlu0 0
    %285 = vperm.xlu0 %284, %v281
    %v286 = vpop.permute.xlu0 %285
    %289 = vset.pattern.permute.xlu0 0
    %290 = vperm.xlu0 %289, %v282
    %v291 = vpop.permute.xlu0 %290
    %v293 = vmul.f32 %v279, %v286
    %v294 = vmul.f32 %v280, %v291
    %v295 = vadd.f32 %v293, %v294
    %v296 = vrot.slane %v295, 4
    %v297 = vadd.f32 %v295, %v296
    %v298 = vrot.slane %v297, 2
    %v299 = vadd.f32 %v297, %v298
    %v300 = vrot.slane %v299, 1
    %v301 = vadd.f32 %v299, %v300
    %v302 = vld [vmem:[#allocation2] sm:$0x1]
    %304 = vset.pattern.permute.xlu0 0
    %305 = vperm.xlu0 %304, %v302
    %v306 = vpop.permute.xlu0 %305
    %v308 = vlaneseq
    %v309 = vshrl.u32 %v308, 7
    %v310 = vsub.s32 0, %v309
    %v311 = vrot.slane %v306, %v310
    %v312 = vadd.f32 %v301, %v311
    %v313 = vsub.f32 0.0, %v312
    %v314 = vmul.f32 %v313, 1.442695
    %v315 = vpow.pop %v314
    %v316 = vadd.f32 %v315, 1.0
    %v317 = vrcp.pop %v316
    %318 = vst [vmem:[#allocation6] sm:$0x1] %v317
    // Predicated region
    $region34: #{tpu_custom_call.1} parent=1 // pred_check
      _
    $region35: #{tpu_custom_call.1} parent=1 // pred_check_branch
      %320 = sbr.rel (0) target = $region37
    $region36: #{tpu_custom_call.1} parent=1 // pred_region
      %s322 = ssub.s32 16, 16
      %323 = vsyncadd [#allocation5], %s322
      %s325 = sshll.u32 [#allocation6], 4
      %s326 = int_to_ptr.vmem [resolvable:$true] %s325
      %328 = dma.vmem_to_hbm [thread:$0]  %s326, 16, %s7, [#allocation5]
    $region37: #{tpu_custom_call.1} parent=1 // pred_fallthru
      _
    // Predicated region
    $region38: #{tpu_custom_call.1} parent=1 // pred_check
      _
    $region39: #{tpu_custom_call.1} parent=1 // pred_check_branch
      %330 = sbr.rel (0) target = $region41
    $region40: #{tpu_custom_call.1} parent=1 // pred_region
      %331 = dma.done [#allocation5], 16
    $region41: #{tpu_custom_call.1} parent=1 // pred_fallthru
      _
    %332 = vsyncpa [#allocation4], 1
    %333 = vsyncpa [#allocation5], 1

</llo_original>
